<compile_context>
chip_gen: v5e
topology: v5e:2x2
jax: 0.10.0
libtpu: 0.0.40
codegen_flags: <defaults>
</compile_context>

<pallas_src>
import functools

import jax
import jax.numpy as jnp
from jax.experimental import pallas as pl
from jax.experimental.pallas import tpu as pltpu


# --------------------------------------------------------------------------
# Kernels
# --------------------------------------------------------------------------
def _rms_norm_gated_kernel(x_ref, g_ref, w_ref, o_ref, *, eps, activation,
                           inv_n):
    """Plain path: the feature dim spans the whole lane axis (N >= 128 etc.)."""
    x = x_ref[...].astype(jnp.float32)          # (TM, N)
    g = g_ref[...].astype(jnp.float32)          # (TM, N)
    w = w_ref[...].astype(jnp.float32)          # (1,  N)

    mean_sq = jnp.sum(x * x, axis=-1, keepdims=True) * inv_n    # (TM, 1)
    rstd = jax.lax.rsqrt(mean_sq + eps)
    y = x * rstd * w

    sig_g = jax.nn.sigmoid(g)
    if activation in ("swish", "silu"):
        y = y * (g * sig_g)
    else:  # "sigmoid"
        y = y * sig_g

    o_ref[...] = y.astype(o_ref.dtype)


def _rms_norm_gated_kernel_folded(x_ref, g_ref, w_ref, seg_ref, o_ref, *,
                                  eps, activation):
    """Lane-folded path: each 128-lane row holds 128//N original rows.

    seg_ref is a precomputed (128, 128) block-diagonal constant whose nonzero
    entries are 1/N (exact, N is a power of two).  One small MXU matmul does
    the segmented sum-of-squares, the 1/N scaling, and the in-segment
    broadcast at once; the MXU is otherwise idle here, so this is ~free.
    """
    x = x_ref[...].astype(jnp.float32)          # (TM, 128)
    g = g_ref[...].astype(jnp.float32)          # (TM, 128)
    w = w_ref[...].astype(jnp.float32)          # (1,  128)

    xsq = x * x
    mean_sq = jnp.dot(xsq, seg_ref[...],
                      preferred_element_type=jnp.float32,
                      precision=jax.lax.Precision.HIGHEST)       # (TM, 128)
    rstd = jax.lax.rsqrt(mean_sq + eps)
    y = x * rstd * w

    sig_g = jax.nn.sigmoid(g)
    if activation in ("swish", "silu"):
        y = y * (g * sig_g)
    else:  # "sigmoid"
        y = y * sig_g

    o_ref[...] = y.astype(o_ref.dtype)


# --------------------------------------------------------------------------
# Tiling heuristics
# --------------------------------------------------------------------------
def _round_up(v, m):
    return ((v + m - 1) // m) * m


def _vmem_limit_bytes():
    """Per-generation VMEM budget: ~3/4 of per-core VMEM, capped at 96 MiB."""
    try:
        cap = int(pltpu.get_tpu_info().vmem_capacity_bytes)
    except Exception:
        cap = 64 << 20                    # safe fallback (v7x-sized)
    return max(32 << 20, min(cap * 3 // 4, 96 << 20))


def _choose_row_tile(m_rows, nl, itemsize, vmem_limit):
    """Pick the per-step row tile for a streaming, HBM-bound kernel."""
    sub = max(8, 32 // itemsize)          # sublane packing: 8 f32 / 16 bf16
    # Per-row VMEM footprint:
    #   double-buffered I/O tiles (x, g, out)        : 6 * nl * itemsize
    #   live f32 intermediates inside the body (~5)  : 5 * nl * 4
    bytes_per_row = 6 * nl * itemsize + 5 * nl * 4
    tile_budget = int(vmem_limit * 0.75)  # headroom for seg const / misc
    tm = max(sub, tile_budget // bytes_per_row)
    tm = min(tm, 8192)                    # diminishing returns past ~4 MiB/tile
    # Target >= 8 grid steps when M permits, so (a) both v7x TensorCores get
    # >= 3-4 pipelined steps each and (b) single-TC chips get real
    # DMA/compute overlap from double buffering.
    if m_rows >= 8 * sub:
        tm = min(tm, _round_up(pl.cdiv(m_rows, 8), sub))
    elif m_rows >= 2 * sub:
        tm = min(tm, _round_up(pl.cdiv(m_rows, 2), sub))
    if tm >= m_rows:
        return m_rows                     # full-extent block (always legal)
    return max(sub, (tm // sub) * sub)


# --------------------------------------------------------------------------
# Wrapper
# --------------------------------------------------------------------------
def fused_rms_norm_gated(x, g, weight, *, eps=1e-5, activation="swish"):
    """Forward of FusedRMSNormGated (no residual, prenorm=False)."""
    if activation not in ("swish", "silu", "sigmoid"):
        raise ValueError(f"Unsupported activation: {activation}")
    assert x.shape == g.shape, (x.shape, g.shape)
    x_shape_og = x.shape
    n = x.shape[-1]
    assert weight.shape == (n,), weight.shape

    x2 = x.reshape(-1, n)
    g2 = g.reshape(-1, n)
    m = x2.shape[0]
    itemsize = jnp.dtype(x.dtype).itemsize

    # Lane-dense fold for small hidden sizes: pack k = 128 // n rows into the
    # 128-lane axis (row-major reshape -> no HBM data movement).  If M is not
    # a multiple of k we pad a handful of rows so the whole stream stays
    # lane-dense (lane-dense stores are the biggest single lever here).
    fold = (n < 128) and (128 % n == 0)
    pad_rows = 0
    seg = None
    if fold:
        k = 128 // n
        if m % k != 0:
            pad_rows = k - (m % k)
            x2 = jnp.pad(x2, ((0, pad_rows), (0, 0)))
            g2 = jnp.pad(g2, ((0, pad_rows), (0, 0)))
        nl = 128
        m_rows = (m + pad_rows) // k
        x2 = x2.reshape(m_rows, nl)
        g2 = g2.reshape(m_rows, nl)
        w2 = jnp.tile(weight, k).reshape(1, nl)
        # Block-diagonal 1/n constant (n is a power of two -> exact in f32).
        ri = jnp.arange(nl, dtype=jnp.int32)[:, None] // n
        ci = jnp.arange(nl, dtype=jnp.int32)[None, :] // n
        seg = jnp.where(ri == ci, jnp.float32(1.0 / n), jnp.float32(0.0))
    else:
        nl = n
        m_rows = m
        w2 = weight.reshape(1, n)

    vmem_limit = _vmem_limit_bytes()
    tm = _choose_row_tile(m_rows, nl, itemsize, vmem_limit)
    grid = (pl.cdiv(m_rows, tm),)         # ragged last block is clipped

    cost = pl.CostEstimate(
        flops=int(10 * m_rows * nl),
        transcendentals=int(2 * m_rows * nl),           # sigmoid + rsqrt
        bytes_accessed=int(3 * m_rows * nl * itemsize + nl * 4))

    common = dict(
        out_shape=jax.ShapeDtypeStruct((m_rows, nl), x.dtype),
        grid=grid,
        out_specs=pl.BlockSpec((tm, nl), lambda i: (i, 0)),
        compiler_params=pltpu.CompilerParams(
            dimension_semantics=("parallel",),
            vmem_limit_bytes=vmem_limit),
        cost_estimate=cost,
    )

    if fold:
        kernel = functools.partial(
            _rms_norm_gated_kernel_folded, eps=eps, activation=activation)
        out = pl.pallas_call(
            kernel,
            in_specs=[
                pl.BlockSpec((tm, nl), lambda i: (i, 0)),   # x rows
                pl.BlockSpec((tm, nl), lambda i: (i, 0)),   # g rows
                pl.BlockSpec((1, nl), lambda i: (0, 0)),    # weight (const)
                pl.BlockSpec((nl, nl), lambda i: (0, 0)),   # seg const
            ],
            **common,
        )(x2, g2, w2, seg)
        out = out.reshape(m + pad_rows, n)
        if pad_rows:
            out = out[:m]
    else:
        kernel = functools.partial(
            _rms_norm_gated_kernel, eps=eps, activation=activation,
            inv_n=1.0 / n)
        out = pl.pallas_call(
            kernel,
            in_specs=[
                pl.BlockSpec((tm, nl), lambda i: (i, 0)),   # x rows
                pl.BlockSpec((tm, nl), lambda i: (i, 0)),   # g rows
                pl.BlockSpec((1, nl), lambda i: (0, 0)),    # weight (const)
            ],
            **common,
        )(x2, g2, w2)

    return out.reshape(x_shape_og)


# --------------------------------------------------------------------------
# Reference + self-test
# --------------------------------------------------------------------------
def _reference(x, g, weight, eps=1e-5, activation="swish"):
    xf = x.astype(jnp.float32)
    gf = g.astype(jnp.float32)
    wf = weight.astype(jnp.float32)
    var = jnp.mean(xf * xf, axis=-1, keepdims=True)
    y = xf * jax.lax.rsqrt(var + eps) * wf
    sig = jax.nn.sigmoid(gf)
    if activation in ("swish", "silu"):
        y = y * gf * sig
    else:
        y = y * sig
    return y.astype(x.dtype)


if __name__ == "__main__":
    key = jax.random.PRNGKey(0)
    k1, k2, k3, k4, k5, k6, k7, k8 = jax.random.split(key, 8)

    # Case 1: module config hidden_size=32 (lane-folded path), swish, eps=1e-5.
    hidden = 32
    weight = jnp.ones((hidden,), dtype=jnp.float32)   # reset_parameters() -> ones
    x = jax.random.normal(k1, (2, 8, hidden), dtype=jnp.float32)
    g = jax.random.normal(k2, (2, 8, hidden), dtype=jnp.float32)
    out = jax.block_until_ready(fused_rms_norm_gated(x, g, weight, eps=1e-5))
    ref = _reference(x, g, weight, eps=1e-5)
    assert out.shape == x.shape and out.dtype == x.dtype
    assert jnp.allclose(out, ref, atol=1e-5, rtol=1e-5), \
        float(jnp.max(jnp.abs(out - ref)))

    # Case 2: N >= 128 path, ragged last row-block, multi-step grid, sigmoid.
    hidden = 128
    weight2 = jax.random.normal(k3, (hidden,), dtype=jnp.float32)
    x = jax.random.normal(k4, (4, 67, hidden), dtype=jnp.float32)
    g = jax.random.normal(k5, (4, 67, hidden), dtype=jnp.float32)
    out = jax.block_until_ready(
        fused_rms_norm_gated(x, g, weight2, activation="sigmoid"))
    ref = _reference(x, g, weight2, activation="sigmoid")
    assert jnp.allclose(out, ref, atol=1e-5, rtol=1e-5), \
        float(jnp.max(jnp.abs(out - ref)))

    # Case 3: bf16 inputs/outputs (packed loads/stores; f32 math in-register).
    hidden = 256
    weight3 = jnp.ones((hidden,), dtype=jnp.float32)
    x = jax.random.normal(k6, (2, 64, hidden), dtype=jnp.bfloat16)
    g = jax.random.normal(k7, (2, 64, hidden), dtype=jnp.bfloat16)
    out = jax.block_until_ready(fused_rms_norm_gated(x, g, weight3))
    ref = _reference(x, g, weight3)
    assert out.dtype == jnp.bfloat16
    assert jnp.allclose(out.astype(jnp.float32), ref.astype(jnp.float32),
                        atol=2e-2, rtol=2e-2)

    # Case 4: small-N fold with M not a multiple of 128//N (M-pad path).
    hidden = 32
    weight4 = jax.random.normal(k8, (hidden,), dtype=jnp.float32)
    x = jax.random.normal(k1, (3, 6, hidden), dtype=jnp.float32)   # M=18, k=4
    g = jax.random.normal(k2, (3, 6, hidden), dtype=jnp.float32)
    out = jax.block_until_ready(fused_rms_norm_gated(x, g, weight4))
    ref = _reference(x, g, weight4)
    assert out.shape == x.shape
    assert jnp.allclose(out, ref, atol=1e-5, rtol=1e-5), \
        float(jnp.max(jnp.abs(out - ref)))

    print("KERNEL_OK")
</pallas_src>

<mosaic_0001>
module attributes {stable_mosaic.version = 11 : i64} {
  func.func @_rms_norm_gated_kernel_folded(%arg0: i32, %arg1: memref<4x128xf32, #tpu.memory_space<vmem>>, %arg2: memref<4x128xf32, #tpu.memory_space<vmem>>, %arg3: memref<1x128xf32, #tpu.memory_space<vmem>>, %arg4: memref<128x128xf32, #tpu.memory_space<vmem>>, %arg5: memref<4x128xf32, #tpu.memory_space<vmem>>) attributes {dimension_semantics = [#tpu.dimension_semantics<parallel>], iteration_bounds = array<i64: 1>, scalar_prefetch = 0 : i64, scratch_operands = 0 : i64, tpu.core_type = #tpu.core_type<tc>, window_params = [{transform_indices = @transform_0, window_bounds = array<i64: 4, 128>}, {transform_indices = @transform_1, window_bounds = array<i64: 4, 128>}, {pipeline_mode = #tpu.pipeline_mode<synchronous>, transform_indices = @transform_2, window_bounds = array<i64: 1, 128>}, {pipeline_mode = #tpu.pipeline_mode<synchronous>, transform_indices = @transform_3, window_bounds = array<i64: 128, 128>}, {transform_indices = @transform_4, window_bounds = array<i64: 4, 128>}]} {
    %c0 = arith.constant 0 : index
    %c0_0 = arith.constant 0 : index
    %0 = vector.load %arg1[%c0, %c0_0] : memref<4x128xf32, #tpu.memory_space<vmem>>, vector<4x128xf32>
    %c0_1 = arith.constant 0 : index
    %c0_2 = arith.constant 0 : index
    %1 = vector.load %arg2[%c0_1, %c0_2] : memref<4x128xf32, #tpu.memory_space<vmem>>, vector<4x128xf32>
    %c0_3 = arith.constant 0 : index
    %c0_4 = arith.constant 0 : index
    %2 = vector.load %arg3[%c0_3, %c0_4] : memref<1x128xf32, #tpu.memory_space<vmem>>, vector<1x128xf32>
    %3 = arith.mulf %0, %0 : vector<4x128xf32>
    %c0_5 = arith.constant 0 : index
    %c0_6 = arith.constant 0 : index
    %4 = vector.load %arg4[%c0_5, %c0_6] : memref<128x128xf32, #tpu.memory_space<vmem>>, vector<128x128xf32>
    %cst = arith.constant dense<0.000000e+00> : vector<4x128xf32>
    %5 = tpu.matmul %3, %4, %cst {dimension_numbers = #tpu.dot_dimension_numbers<[1], [0], [0], [1], [0, 0, 1, 1], [], []>, precision = #tpu.contract_precision<fp32>} : vector<4x128xf32>, vector<128x128xf32>, vector<4x128xf32> -> vector<4x128xf32>
    %cst_7 = arith.constant 9.99999974E-6 : f32
    %6 = vector.broadcast %cst_7 : f32 to vector<4x128xf32>
    %7 = arith.addf %5, %6 : vector<4x128xf32>
    %8 = math.rsqrt %7 : vector<4x128xf32>
    %9 = arith.mulf %0, %8 : vector<4x128xf32>
    %10 = vector.broadcast %2 : vector<1x128xf32> to vector<4x128xf32>
    %11 = arith.mulf %9, %10 : vector<4x128xf32>
    %12 = arith.negf %1 : vector<4x128xf32>
    %13 = math.exp %12 : vector<4x128xf32>
    %cst_8 = arith.constant 1.000000e+00 : f32
    %14 = vector.broadcast %cst_8 : f32 to vector<4x128xf32>
    %15 = arith.addf %14, %13 : vector<4x128xf32>
    %16 = arith.divf %14, %15 : vector<4x128xf32>
    %17 = arith.mulf %1, %16 : vector<4x128xf32>
    %18 = arith.mulf %11, %17 : vector<4x128xf32>
    %c0_9 = arith.constant 0 : index
    %c0_10 = arith.constant 0 : index
    %19 = vector.load %arg5[%c0_9, %c0_10] : memref<4x128xf32, #tpu.memory_space<vmem>>, vector<4x128xf32>
    tpu.vector_store %arg5[%c0_9, %c0_10], %18 {strides = array<i32>} : memref<4x128xf32, #tpu.memory_space<vmem>>, vector<4x128xf32>,
    return
  }
  func.func @transform_0(%arg0: i32) -> (i32, i32) {
    %c0_i32 = arith.constant 0 : i32
    %c0_i32_0 = arith.constant 0 : i32
    return %arg0, %c0_i32 : i32, i32
  }
  func.func @transform_1(%arg0: i32) -> (i32, i32) {
    %c0_i32 = arith.constant 0 : i32
    %c0_i32_0 = arith.constant 0 : i32
    return %arg0, %c0_i32 : i32, i32
  }
  func.func @transform_2(%arg0: i32) -> (i32, i32) {
    %c0_i32 = arith.constant 0 : i32
    %c0_i32_0 = arith.constant 0 : i32
    %c0_i32_1 = arith.constant 0 : i32
    return %c0_i32, %c0_i32_0 : i32, i32
  }
  func.func @transform_3(%arg0: i32) -> (i32, i32) {
    %c0_i32 = arith.constant 0 : i32
    %c0_i32_0 = arith.constant 0 : i32
    %c0_i32_1 = arith.constant 0 : i32
    return %c0_i32, %c0_i32_0 : i32, i32
  }
  func.func @transform_4(%arg0: i32) -> (i32, i32) {
    %c0_i32 = arith.constant 0 : i32
    %c0_i32_0 = arith.constant 0 : i32
    return %arg0, %c0_i32 : i32, i32
  }
}

</mosaic_0001>

<llo_original>
// kernel: tpu_custom_call.1
$region0: #{tpu_custom_call.1}
  #allocation0 [shape = 'u32[]', space=smem, size = 0x4, offset = 0x4, fixed_abs, tag = 'smem constant byte address 0x4 - core index']
  #allocation1 [shape = 'u32[72,128]{1,0:T(1,128)}', space=vmem, size = 0x9000, scoped, tag = 'internal scratch']
  %s0 = inlined_call_operand.hbm [shape: f32[4,128], index: 0, kind: input, shape index: {}]
  %s1 = inlined_call_operand.hbm [shape: f32[4,128], index: 1, kind: input, shape index: {}]
  %s2 = inlined_call_operand.vmem [shape: f32[1,128], index: 2, kind: input, shape index: {}]
  %s3 = inlined_call_operand.hbm [shape: f32[128,128], index: 3, kind: input, shape index: {}]
  %s4 = inlined_call_operand.hbm [shape: f32[4,128], index: 4, kind: output, shape index: {}]
  %s5 = sld [smem:[#allocation0]]
  $region38: #{tpu_custom_call.1} parent=0
    _
  %s7 = ssub.s32 1, %s5
  %s8 = scalar_select 0, %s7, %s5
  $region1: #{tpu_custom_call.1} parent=0
    #allocation2 [shape = 'u8[2048]{0}', space=vmem, size = 0x800, scoped, tag = 'input window, operand 0, single buffered']
    #allocation3 [shape = 's32[1]{0}', space=sflag, size = 0x4, scoped, tag = 'scoped memory for tpu_custom_call.1']
    #allocation4 [shape = 's32[1]{0}', space=sflag, size = 0x4, scoped, tag = 'scoped memory for tpu_custom_call.1']
    #allocation5 [shape = 'u8[2048]{0}', space=vmem, size = 0x800, scoped, tag = 'input window, operand 1, single buffered']
    #allocation6 [shape = 's32[1]{0}', space=sflag, size = 0x4, scoped, tag = 'scoped memory for tpu_custom_call.1']
    #allocation7 [shape = 'u8[65536]{0}', space=vmem, size = 0x10000, scoped, tag = 'input window, operand 3, single buffered']
    #allocation8 [shape = 'u8[2048]{0}', space=vmem, size = 0x800, scoped, tag = 'output window, operand 0, single buffered']
    %9 = vsyncpa [#allocation3], 0
    %10 = vsyncpa [#allocation6], 0
    %11 = vsyncpa [#allocation4], 0
    // Predicated region
    $region2: #{tpu_custom_call.1} parent=1 // pred_check
      _
    $region3: #{tpu_custom_call.1} parent=1 // pred_check_branch
      %13 = sbr.rel (0) target = $region5
    $region4: #{tpu_custom_call.1} parent=1 // pred_region
      %15 = vsyncadd [#allocation3], 0
      %s17 = sshll.u32 %s0, 4
      %s18 = int_to_ptr.hbm [resolvable:$true] %s17
      %s19 = sshll.u32 [#allocation2], 4
      %s20 = int_to_ptr.vmem [resolvable:$true] %s19
      %22 = dma.hbm_to_vmem [thread:$0]  %s18, 64, %s20, [#allocation3]
    $region5: #{tpu_custom_call.1} parent=1 // pred_fallthru
      _
    // Predicated region
    $region6: #{tpu_custom_call.1} parent=1 // pred_check
      _
    $region7: #{tpu_custom_call.1} parent=1 // pred_check_branch
      %24 = sbr.rel (0) target = $region9
    $region8: #{tpu_custom_call.1} parent=1 // pred_region
      %26 = vsyncadd [#allocation6], 0
      %s28 = sshll.u32 %s1, 4
      %s29 = int_to_ptr.hbm [resolvable:$true] %s28
      %s30 = sshll.u32 [#allocation5], 4
      %s31 = int_to_ptr.vmem [resolvable:$true] %s30
      %33 = dma.hbm_to_vmem [thread:$0]  %s29, 64, %s31, [#allocation6]
    $region9: #{tpu_custom_call.1} parent=1 // pred_fallthru
      _
    // Predicated region
    $region10: #{tpu_custom_call.1} parent=1 // pred_check
      _
    $region11: #{tpu_custom_call.1} parent=1 // pred_check_branch
      %35 = sbr.rel (0) target = $region13
    $region12: #{tpu_custom_call.1} parent=1 // pred_region
      _
    $region13: #{tpu_custom_call.1} parent=1 // pred_fallthru
      _
    // Predicated region
    $region14: #{tpu_custom_call.1} parent=1 // pred_check
      _
    $region15: #{tpu_custom_call.1} parent=1 // pred_check_branch
      %37 = sbr.rel (0) target = $region17
    $region16: #{tpu_custom_call.1} parent=1 // pred_region
      %39 = vsyncadd [#allocation6], 0
      %s40 = sshll.u32 %s3, 4
      %s41 = int_to_ptr.hbm [resolvable:$true] %s40
      %s42 = sshll.u32 [#allocation7], 4
      %s43 = int_to_ptr.vmem [resolvable:$true] %s42
      %48 = dma.hbm_to_vmem [thread:$0]  %s41, 2048, %s43, [#allocation6], 128, 128, 8
    $region17: #{tpu_custom_call.1} parent=1 // pred_fallthru
      _
    // Predicated region
    $region18: #{tpu_custom_call.1} parent=1 // pred_check
      _
    $region19: #{tpu_custom_call.1} parent=1 // pred_check_branch
      %50 = sbr.rel (0) target = $region21
    $region20: #{tpu_custom_call.1} parent=1 // pred_region
      %52 = dma.done [#allocation3], 64
    $region21: #{tpu_custom_call.1} parent=1 // pred_fallthru
      _
    // Predicated region
    $region22: #{tpu_custom_call.1} parent=1 // pred_check
      _
    $region23: #{tpu_custom_call.1} parent=1 // pred_check_branch
      %54 = sbr.rel (0) target = $region25
    $region24: #{tpu_custom_call.1} parent=1 // pred_region
      %56 = dma.done [#allocation6], 64
    $region25: #{tpu_custom_call.1} parent=1 // pred_fallthru
      _
    // Predicated region
    $region26: #{tpu_custom_call.1} parent=1 // pred_check
      _
    $region27: #{tpu_custom_call.1} parent=1 // pred_check_branch
      %58 = sbr.rel (0) target = $region29
    $region28: #{tpu_custom_call.1} parent=1 // pred_region
      %60 = dma.done [#allocation6], 2048
    $region29: #{tpu_custom_call.1} parent=1 // pred_fallthru
      _
    %v61 = vld [vmem:[#allocation2] sm:$0xf]
    %v62 = vld [vmem:[#allocation5] sm:$0xf]
    %v63 = vld [vmem:[%s2] sm:$0x1]
    %v64 = vmul.f32 %v61, %v61
    %v65 = vld [vmem:[#allocation7] sm:$0xff]
    %v66 = vld [vmem:[#allocation7 + $0x8] sm:$0xff]
    %v67 = vld [vmem:[#allocation7 + $0x10] sm:$0xff]
    %v68 = vld [vmem:[#allocation7 + $0x18] sm:$0xff]
    %v69 = vld [vmem:[#allocation7 + $0x20] sm:$0xff]
    %v70 = vld [vmem:[#allocation7 + $0x28] sm:$0xff]
    %v71 = vld [vmem:[#allocation7 + $0x30] sm:$0xff]
    %v72 = vld [vmem:[#allocation7 + $0x38] sm:$0xff]
    %v73 = vld [vmem:[#allocation7 + $0x40] sm:$0xff]
    %v74 = vld [vmem:[#allocation7 + $0x48] sm:$0xff]
    %v75 = vld [vmem:[#allocation7 + $0x50] sm:$0xff]
    %v76 = vld [vmem:[#allocation7 + $0x58] sm:$0xff]
    %v77 = vld [vmem:[#allocation7 + $0x60] sm:$0xff]
    %v78 = vld [vmem:[#allocation7 + $0x68] sm:$0xff]
    %v79 = vld [vmem:[#allocation7 + $0x70] sm:$0xff]
    %v80 = vld [vmem:[#allocation7 + $0x78] sm:$0xff]
    %v81 = vand.u32 %v80, 4294901760
    %82 = vmatpush.msra.mxu0 %v81
    %v83 = vand.u32 %v79, 4294901760
    %84 = vmatpush.msra.mxu0 %v83
    %v85 = vand.u32 %v78, 4294901760
    %86 = vmatpush.msra.mxu0 %v85
    %v87 = vand.u32 %v77, 4294901760
    %88 = vmatpush.msra.mxu0 %v87
    %v89 = vand.u32 %v76, 4294901760
    %90 = vmatpush.msra.mxu0 %v89
    %v91 = vand.u32 %v75, 4294901760
    %92 = vmatpush.msra.mxu0 %v91
    %v93 = vand.u32 %v74, 4294901760
    %94 = vmatpush.msra.mxu0 %v93
    %v95 = vand.u32 %v73, 4294901760
    %96 = vmatpush.msra.mxu0 %v95
    %v97 = vand.u32 %v72, 4294901760
    %98 = vmatpush.msra.mxu0 %v97
    %v99 = vand.u32 %v71, 4294901760
    %100 = vmatpush.msra.mxu0 %v99
    %v101 = vand.u32 %v70, 4294901760
    %102 = vmatpush.msra.mxu0 %v101
    %v103 = vand.u32 %v69, 4294901760
    %104 = vmatpush.msra.mxu0 %v103
    %v105 = vand.u32 %v68, 4294901760
    %106 = vmatpush.msra.mxu0 %v105
    %v107 = vand.u32 %v67, 4294901760
    %108 = vmatpush.msra.mxu0 %v107
    %v109 = vand.u32 %v66, 4294901760
    %110 = vmatpush.msra.mxu0 %v109
    %v111 = vand.u32 %v65, 4294901760
    %112 = vmatpush.msra.mxu0 %v111
    %v113 = vand.u32 %v64, 4294901760
    %v114 = vsub.f32 %v64, %v113
    %v115 = vand.u32 %v114, 4294901760
    %v116 = vsub.f32 %v114, %v115
    %v117 = vand.u32 %v116, 4294901760
    %118 = vmatmul.f32.gmra.mxu0 %v117
    %v119 = vpop.f32.mrf.mxu0
    %v120 = vadd.f32 1e-05, %v119
    %121 = vdwg.mxu0
    %v122 = vand.u32 %v80, 4294901760
    %v123 = vsub.f32 %v80, %v122
    %v124 = vand.u32 %v123, 4294901760
    %v125 = vsub.f32 %v123, %v124
    %v126 = vand.u32 %v125, 4294901760
    %127 = vmatpush.msra.mxu0 %v126
    %v128 = vand.u32 %v79, 4294901760
    %v129 = vsub.f32 %v79, %v128
    %v130 = vand.u32 %v129, 4294901760
    %v131 = vsub.f32 %v129, %v130
    %v132 = vand.u32 %v131, 4294901760
    %133 = vmatpush.msra.mxu0 %v132
    %v134 = vand.u32 %v78, 4294901760
    %v135 = vsub.f32 %v78, %v134
    %v136 = vand.u32 %v135, 4294901760
    %v137 = vsub.f32 %v135, %v136
    %v138 = vand.u32 %v137, 4294901760
    %139 = vmatpush.msra.mxu0 %v138
    %v140 = vand.u32 %v77, 4294901760
    %v141 = vsub.f32 %v77, %v140
    %v142 = vand.u32 %v141, 4294901760
    %v143 = vsub.f32 %v141, %v142
    %v144 = vand.u32 %v143, 4294901760
    %145 = vmatpush.msra.mxu0 %v144
    %v146 = vand.u32 %v76, 4294901760
    %v147 = vsub.f32 %v76, %v146
    %v148 = vand.u32 %v147, 4294901760
    %v149 = vsub.f32 %v147, %v148
    %v150 = vand.u32 %v149, 4294901760
    %151 = vmatpush.msra.mxu0 %v150
    %v152 = vand.u32 %v75, 4294901760
    %v153 = vsub.f32 %v75, %v152
    %v154 = vand.u32 %v153, 4294901760
    %v155 = vsub.f32 %v153, %v154
    %v156 = vand.u32 %v155, 4294901760
    %157 = vmatpush.msra.mxu0 %v156
    %v158 = vand.u32 %v74, 4294901760
    %v159 = vsub.f32 %v74, %v158
    %v160 = vand.u32 %v159, 4294901760
    %v161 = vsub.f32 %v159, %v160
    %v162 = vand.u32 %v161, 4294901760
    %163 = vmatpush.msra.mxu0 %v162
    %v164 = vand.u32 %v73, 4294901760
    %v165 = vsub.f32 %v73, %v164
    %v166 = vand.u32 %v165, 4294901760
    %v167 = vsub.f32 %v165, %v166
    %v168 = vand.u32 %v167, 4294901760
    %169 = vmatpush.msra.mxu0 %v168
    %v170 = vand.u32 %v72, 4294901760
    %v171 = vsub.f32 %v72, %v170
    %v172 = vand.u32 %v171, 4294901760
    %v173 = vsub.f32 %v171, %v172
    %v174 = vand.u32 %v173, 4294901760
    %175 = vmatpush.msra.mxu0 %v174
    %v176 = vand.u32 %v71, 4294901760
    %v177 = vsub.f32 %v71, %v176
    %v178 = vand.u32 %v177, 4294901760
    %v179 = vsub.f32 %v177, %v178
    %v180 = vand.u32 %v179, 4294901760
    %181 = vmatpush.msra.mxu0 %v180
    %v182 = vand.u32 %v70, 4294901760
    %v183 = vsub.f32 %v70, %v182
    %v184 = vand.u32 %v183, 4294901760
    %v185 = vsub.f32 %v183, %v184
    %v186 = vand.u32 %v185, 4294901760
    %187 = vmatpush.msra.mxu0 %v186
    %v188 = vand.u32 %v69, 4294901760
    %v189 = vsub.f32 %v69, %v188
    %v190 = vand.u32 %v189, 4294901760
    %v191 = vsub.f32 %v189, %v190
    %v192 = vand.u32 %v191, 4294901760
    %193 = vmatpush.msra.mxu0 %v192
    %v194 = vand.u32 %v68, 4294901760
    %v195 = vsub.f32 %v68, %v194
    %v196 = vand.u32 %v195, 4294901760
    %v197 = vsub.f32 %v195, %v196
    %v198 = vand.u32 %v197, 4294901760
    %199 = vmatpush.msra.mxu0 %v198
    %v200 = vand.u32 %v67, 4294901760
    %v201 = vsub.f32 %v67, %v200
    %v202 = vand.u32 %v201, 4294901760
    %v203 = vsub.f32 %v201, %v202
    %v204 = vand.u32 %v203, 4294901760
    %205 = vmatpush.msra.mxu0 %v204
    %v206 = vand.u32 %v66, 4294901760
    %v207 = vsub.f32 %v66, %v206
    %v208 = vand.u32 %v207, 4294901760
    %v209 = vsub.f32 %v207, %v208
    %v210 = vand.u32 %v209, 4294901760
    %211 = vmatpush.msra.mxu0 %v210
    %v212 = vand.u32 %v65, 4294901760
    %v213 = vsub.f32 %v65, %v212
    %v214 = vand.u32 %v213, 4294901760
    %v215 = vsub.f32 %v213, %v214
    %v216 = vand.u32 %v215, 4294901760
    %217 = vmatpush.msra.mxu0 %v216
    %v218 = vand.u32 %v64, 4294901760
    %219 = vmatmul.f32.gmra.mxu0 %v218
    %v220 = vpop.f32.mrf.mxu0
    %v221 = vadd.f32 %v120, %v220
    %222 = vdwg.mxu0
    %v223 = vand.u32 %v80, 4294901760
    %v224 = vsub.f32 %v80, %v223
    %225 = vmatpush.msra.mxu0 %v224
    %v226 = vand.u32 %v79, 4294901760
    %v227 = vsub.f32 %v79, %v226
    %228 = vmatpush.msra.mxu0 %v227
    %v229 = vand.u32 %v78, 4294901760
    %v230 = vsub.f32 %v78, %v229
    %231 = vmatpush.msra.mxu0 %v230
    %v232 = vand.u32 %v77, 4294901760
    %v233 = vsub.f32 %v77, %v232
    %234 = vmatpush.msra.mxu0 %v233
    %v235 = vand.u32 %v76, 4294901760
    %v236 = vsub.f32 %v76, %v235
    %237 = vmatpush.msra.mxu0 %v236
    %v238 = vand.u32 %v75, 4294901760
    %v239 = vsub.f32 %v75, %v238
    %240 = vmatpush.msra.mxu0 %v239
    %v241 = vand.u32 %v74, 4294901760
    %v242 = vsub.f32 %v74, %v241
    %243 = vmatpush.msra.mxu0 %v242
    %v244 = vand.u32 %v73, 4294901760
    %v245 = vsub.f32 %v73, %v244
    %246 = vmatpush.msra.mxu0 %v245
    %v247 = vand.u32 %v72, 4294901760
    %v248 = vsub.f32 %v72, %v247
    %249 = vmatpush.msra.mxu0 %v248
    %v250 = vand.u32 %v71, 4294901760
    %v251 = vsub.f32 %v71, %v250
    %252 = vmatpush.msra.mxu0 %v251
    %v253 = vand.u32 %v70, 4294901760
    %v254 = vsub.f32 %v70, %v253
    %255 = vmatpush.msra.mxu0 %v254
    %v256 = vand.u32 %v69, 4294901760
    %v257 = vsub.f32 %v69, %v256
    %258 = vmatpush.msra.mxu0 %v257
    %v259 = vand.u32 %v68, 4294901760
    %v260 = vsub.f32 %v68, %v259
    %261 = vmatpush.msra.mxu0 %v260
    %v262 = vand.u32 %v67, 4294901760
    %v263 = vsub.f32 %v67, %v262
    %264 = vmatpush.msra.mxu0 %v263
    %v265 = vand.u32 %v66, 4294901760
    %v266 = vsub.f32 %v66, %v265
    %267 = vmatpush.msra.mxu0 %v266
    %v268 = vand.u32 %v65, 4294901760
    %v269 = vsub.f32 %v65, %v268
    %270 = vmatpush.msra.mxu0 %v269
    %v271 = vand.u32 %v64, 4294901760
    %v272 = vsub.f32 %v64, %v271
    %273 = vmatmul.f32.gmra.mxu0 %v272
    %v274 = vpop.f32.mrf.mxu0
    %v275 = vadd.f32 %v221, %v274
    %276 = vdwg.mxu0
    %v277 = vand.u32 %v80, 4294901760
    %278 = vmatpush.msra.mxu0 %v277
    %v279 = vand.u32 %v79, 4294901760
    %280 = vmatpush.msra.mxu0 %v279
    %v281 = vand.u32 %v78, 4294901760
    %282 = vmatpush.msra.mxu0 %v281
    %v283 = vand.u32 %v77, 4294901760
    %284 = vmatpush.msra.mxu0 %v283
    %v285 = vand.u32 %v76, 4294901760
    %286 = vmatpush.msra.mxu0 %v285
    %v287 = vand.u32 %v75, 4294901760
    %288 = vmatpush.msra.mxu0 %v287
    %v289 = vand.u32 %v74, 4294901760
    %290 = vmatpush.msra.mxu0 %v289
    %v291 = vand.u32 %v73, 4294901760
    %292 = vmatpush.msra.mxu0 %v291
    %v293 = vand.u32 %v72, 4294901760
    %294 = vmatpush.msra.mxu0 %v293
    %v295 = vand.u32 %v71, 4294901760
    %296 = vmatpush.msra.mxu0 %v295
    %v297 = vand.u32 %v70, 4294901760
    %298 = vmatpush.msra.mxu0 %v297
    %v299 = vand.u32 %v69, 4294901760
    %300 = vmatpush.msra.mxu0 %v299
    %v301 = vand.u32 %v68, 4294901760
    %302 = vmatpush.msra.mxu0 %v301
    %v303 = vand.u32 %v67, 4294901760
    %304 = vmatpush.msra.mxu0 %v303
    %v305 = vand.u32 %v66, 4294901760
    %306 = vmatpush.msra.mxu0 %v305
    %v307 = vand.u32 %v65, 4294901760
    %308 = vmatpush.msra.mxu0 %v307
    %v309 = vand.u32 %v64, 4294901760
    %v310 = vsub.f32 %v64, %v309
    %v311 = vand.u32 %v310, 4294901760
    %312 = vmatmul.f32.gmra.mxu0 %v311
    %v313 = vpop.f32.mrf.mxu0
    %v314 = vadd.f32 %v275, %v313
    %315 = vdwg.mxu0
    %v316 = vand.u32 %v80, 4294901760
    %v317 = vsub.f32 %v80, %v316
    %v318 = vand.u32 %v317, 4294901760
    %319 = vmatpush.msra.mxu0 %v318
    %v320 = vand.u32 %v79, 4294901760
    %v321 = vsub.f32 %v79, %v320
    %v322 = vand.u32 %v321, 4294901760
    %323 = vmatpush.msra.mxu0 %v322
    %v324 = vand.u32 %v78, 4294901760
    %v325 = vsub.f32 %v78, %v324
    %v326 = vand.u32 %v325, 4294901760
    %327 = vmatpush.msra.mxu0 %v326
    %v328 = vand.u32 %v77, 4294901760
    %v329 = vsub.f32 %v77, %v328
    %v330 = vand.u32 %v329, 4294901760
    %331 = vmatpush.msra.mxu0 %v330
    %v332 = vand.u32 %v76, 4294901760
    %v333 = vsub.f32 %v76, %v332
    %v334 = vand.u32 %v333, 4294901760
    %335 = vmatpush.msra.mxu0 %v334
    %v336 = vand.u32 %v75, 4294901760
    %v337 = vsub.f32 %v75, %v336
    %v338 = vand.u32 %v337, 4294901760
    %339 = vmatpush.msra.mxu0 %v338
    %v340 = vand.u32 %v74, 4294901760
    %v341 = vsub.f32 %v74, %v340
    %v342 = vand.u32 %v341, 4294901760
    %343 = vmatpush.msra.mxu0 %v342
    %v344 = vand.u32 %v73, 4294901760
    %v345 = vsub.f32 %v73, %v344
    %v346 = vand.u32 %v345, 4294901760
    %347 = vmatpush.msra.mxu0 %v346
    %v348 = vand.u32 %v72, 4294901760
    %v349 = vsub.f32 %v72, %v348
    %v350 = vand.u32 %v349, 4294901760
    %351 = vmatpush.msra.mxu0 %v350
    %v352 = vand.u32 %v71, 4294901760
    %v353 = vsub.f32 %v71, %v352
    %v354 = vand.u32 %v353, 4294901760
    %355 = vmatpush.msra.mxu0 %v354
    %v356 = vand.u32 %v70, 4294901760
    %v357 = vsub.f32 %v70, %v356
    %v358 = vand.u32 %v357, 4294901760
    %359 = vmatpush.msra.mxu0 %v358
    %v360 = vand.u32 %v69, 4294901760
    %v361 = vsub.f32 %v69, %v360
    %v362 = vand.u32 %v361, 4294901760
    %363 = vmatpush.msra.mxu0 %v362
    %v364 = vand.u32 %v68, 4294901760
    %v365 = vsub.f32 %v68, %v364
    %v366 = vand.u32 %v365, 4294901760
    %367 = vmatpush.msra.mxu0 %v366
    %v368 = vand.u32 %v67, 4294901760
    %v369 = vsub.f32 %v67, %v368
    %v370 = vand.u32 %v369, 4294901760
    %371 = vmatpush.msra.mxu0 %v370
    %v372 = vand.u32 %v66, 4294901760
    %v373 = vsub.f32 %v66, %v372
    %v374 = vand.u32 %v373, 4294901760
    %375 = vmatpush.msra.mxu0 %v374
    %v376 = vand.u32 %v65, 4294901760
    %v377 = vsub.f32 %v65, %v376
    %v378 = vand.u32 %v377, 4294901760
    %379 = vmatpush.msra.mxu0 %v378
    %v380 = vand.u32 %v64, 4294901760
    %381 = vmatmul.f32.gmra.mxu0 %v380
    %v382 = vpop.f32.mrf.mxu0
    %v383 = vadd.f32 %v314, %v382
    %384 = vdwg.mxu0
    %v385 = vand.u32 %v80, 4294901760
    %386 = vmatpush.msra.mxu0 %v385
    %v387 = vand.u32 %v79, 4294901760
    %388 = vmatpush.msra.mxu0 %v387
    %v389 = vand.u32 %v78, 4294901760
    %390 = vmatpush.msra.mxu0 %v389
    %v391 = vand.u32 %v77, 4294901760
    %392 = vmatpush.msra.mxu0 %v391
    %v393 = vand.u32 %v76, 4294901760
    %394 = vmatpush.msra.mxu0 %v393
    %v395 = vand.u32 %v75, 4294901760
    %396 = vmatpush.msra.mxu0 %v395
    %v397 = vand.u32 %v74, 4294901760
    %398 = vmatpush.msra.mxu0 %v397
    %v399 = vand.u32 %v73, 4294901760
    %400 = vmatpush.msra.mxu0 %v399
    %v401 = vand.u32 %v72, 4294901760
    %402 = vmatpush.msra.mxu0 %v401
    %v403 = vand.u32 %v71, 4294901760
    %404 = vmatpush.msra.mxu0 %v403
    %v405 = vand.u32 %v70, 4294901760
    %406 = vmatpush.msra.mxu0 %v405
    %v407 = vand.u32 %v69, 4294901760
    %408 = vmatpush.msra.mxu0 %v407
    %v409 = vand.u32 %v68, 4294901760
    %410 = vmatpush.msra.mxu0 %v409
    %v411 = vand.u32 %v67, 4294901760
    %412 = vmatpush.msra.mxu0 %v411
    %v413 = vand.u32 %v66, 4294901760
    %414 = vmatpush.msra.mxu0 %v413
    %v415 = vand.u32 %v65, 4294901760
    %416 = vmatpush.msra.mxu0 %v415
    %v417 = vand.u32 %v64, 4294901760
    %418 = vmatmul.f32.gmra.mxu0 %v417
    %v419 = vpop.f32.mrf.mxu0
    %v420 = vadd.f32 %v383, %v419
    %421 = vdwg.mxu0
    %v422 = vrsqrt.pop %v420
    %v423 = vmul.f32 %v422, %v420
    %v424 = vmul.f32 %v423, %v422
    %v425 = vmul.f32 0.5, %v424
    %v426 = vsub.f32 1.5, %v425
    %v427 = vmul.f32 %v422, %v426
    %vm428 = vweird.f32 %v420
    %vm429 = vweird.f32 %v422
    %vm430 = vmor %vm428, %vm429
    %v431 = vsel %vm430, %v422, %v427
    %v432 = vmul.f32 %v61, %v431
    %v434 = vperm.slane %v63, 0
    %v436 = vmul.f32 %v432, %v434
    %v437 = vxor.u32 %v62, 2147483648
    %v438 = vmul.f32 %v437, 1.442695
    %v439 = vpow.pop %v438
    %v440 = vadd.f32 %v439, 1.0
    %v441 = vrcp.pop %v440
    %v442 = vmul.f32 %v440, %v441
    %v443 = vsub.f32 1.0, %v442
    %v444 = vmul.f32 %v441, %v443
    %v445 = vadd.f32 %v441, %v444
    %vm446 = vweird.f32 %v440
    %vm447 = vweird.f32 %v441
    %vm448 = vmor %vm446, %vm447
    %v449 = vsel %vm448, %v441, %v445
    %v450 = vand.u32 2147483647, %v440
    %vm451 = vcmp.eq.f32.partialorder %v450, 8.507059e+37
    %v452 = vand.u32 %v440, 2147483648
    %v453 = vor.u32 1.1754944e-38, %v452
    %v454 = vsel %vm451, %v453, %v449
    %v455 = vmul.f32 1.0, %v454
    %v456 = vmul.f32 %v62, %v455
    %v457 = vmul.f32 %v436, %v456
    %458 = vst [vmem:[#allocation8] sm:$0xf] %v457
    // Predicated region
    $region30: #{tpu_custom_call.1} parent=1 // pred_check
      _
    $region31: #{tpu_custom_call.1} parent=1 // pred_check_branch
      %460 = sbr.rel (0) target = $region33
    $region32: #{tpu_custom_call.1} parent=1 // pred_region
      %462 = vsyncadd [#allocation4], 0
      %s464 = sshll.u32 [#allocation8], 4
      %s465 = int_to_ptr.vmem [resolvable:$true] %s464
      %s466 = sshll.u32 %s4, 4
      %s467 = int_to_ptr.hbm [resolvable:$true] %s466
      %469 = dma.vmem_to_hbm [thread:$0]  %s465, 64, %s467, [#allocation4]
    $region33: #{tpu_custom_call.1} parent=1 // pred_fallthru
      _
    // Predicated region
    $region34: #{tpu_custom_call.1} parent=1 // pred_check
      _
    $region35: #{tpu_custom_call.1} parent=1 // pred_check_branch
      %471 = sbr.rel (0) target = $region37
    $region36: #{tpu_custom_call.1} parent=1 // pred_region
      %473 = dma.done [#allocation4], 64
    $region37: #{tpu_custom_call.1} parent=1 // pred_fallthru
      _
    %474 = vsyncpa [#allocation3], 1
    %475 = vsyncpa [#allocation6], 1
    %476 = vsyncpa [#allocation4], 1

</llo_original>
